<compile_context>
chip_gen: v5e
topology: v5e:2x2
jax: 0.10.0
libtpu: 0.0.40
codegen_flags: <defaults>
</compile_context>

<pallas_src>
import functools

import jax
import jax.numpy as jnp
from jax.experimental import pallas as pl
from jax.experimental.pallas import tpu as pltpu


# ---------------------------------------------------------------------------
# Kernel
# ---------------------------------------------------------------------------
def _tanimoto_kernel(x_ref, y_ref, o_ref,
                     tpl_ref, sq_ref, s_ref, *,
                     smooth: float, r_total: float):
    """Blocks: x/y (TR, TK); out (1, TK); scratch (1, TK) f32 each."""
    r = pl.program_id(1)

    @pl.when(r == 0)
    def _init():
        tpl_ref[...] = jnp.zeros_like(tpl_ref)
        sq_ref[...] = jnp.zeros_like(sq_ref)
        s_ref[...] = jnp.zeros_like(s_ref)

    x = x_ref[...].astype(jnp.float32)
    y = y_ref[...].astype(jnp.float32)

    # Three partial sums over the (sublane) reduction axis of this block.
    tpl_ref[...] += jnp.sum(x * y, axis=0, keepdims=True)
    sq_ref[...] += jnp.sum(x * x + y * y, axis=0, keepdims=True)
    s_ref[...] += jnp.sum(x + y, axis=0, keepdims=True)

    @pl.when(r == pl.num_programs(1) - 1)
    def _finalize():
        tpl = tpl_ref[...]
        sq = sq_ref[...]
        s = s_ref[...]

        # Direct term.
        score = (tpl + smooth) / (sq - tpl + smooth)

        # Complement term, derived from the same three sums:
        #   tpl_c        = R - s + tpl
        #   sq_c - tpl_c = R - s + (sq - tpl)
        rem = r_total - s
        tpl_c = rem + tpl
        score_c = (tpl_c + smooth) / (rem + (sq - tpl) + smooth)

        o_ref[...] = (0.5 * (score + score_c)).astype(o_ref.dtype)


# ---------------------------------------------------------------------------
# Tiling helpers
# ---------------------------------------------------------------------------
def _pick_tile(total: int, align: int, max_tile: int) -> int:
    """Largest divisor of `total` that is a multiple of `align` and <= max_tile.

    Falls back to the full dimension when no aligned divisor exists (a block
    equal to the array dim is always legal on TPU).
    """
    if total <= max_tile:
        return total
    if total % align != 0:
        return total
    best = align
    t = align
    while t <= max_tile:
        if total % t == 0:
            best = t
        t += align
    return best


# ---------------------------------------------------------------------------
# Wrapper (mirrors TanimotoDist.forward, keepdim=True)
# ---------------------------------------------------------------------------
@functools.partial(jax.jit, static_argnames=("smooth", "dims"))
def _tanimoto_dist_impl(inputs, targets, *, smooth: float, dims: tuple):
    ndim = inputs.ndim
    kept = tuple(d for d in range(ndim) if d not in dims)

    r_size = 1
    for d in dims:
        r_size *= inputs.shape[d]
    k_size = 1
    for d in kept:
        k_size *= inputs.shape[d]

    # Move reduced dims to the front, flatten to (R, K).  For the default
    # dim=0 this is a free reshape (no transpose).
    perm = dims + kept
    x2 = jnp.transpose(inputs, perm).reshape(r_size, k_size)
    y2 = jnp.transpose(targets, perm).reshape(r_size, k_size)

    out_dtype = jnp.result_type(inputs.dtype, targets.dtype)
    if not jnp.issubdtype(out_dtype, jnp.floating):
        out_dtype = jnp.float32

    # Lane-dense K tiles; R tiles sized so each input block is <= 1M elements
    # (4 MiB f32), which double-buffered for two inputs stays ~16 MiB of VMEM.
    tk = _pick_tile(k_size, 128, 8192)
    max_tr = max(8, (1 << 20) // max(tk, 1))
    tr = _pick_tile(r_size, 8, max_tr)

    grid = (k_size // tk, r_size // tr)

    kernel = functools.partial(
        _tanimoto_kernel, smooth=float(smooth), r_total=float(r_size))
    out2 = pl.pallas_call(
        kernel,
        out_shape=jax.ShapeDtypeStruct((1, k_size), out_dtype),
        grid=grid,
        in_specs=[
            pl.BlockSpec((tr, tk), lambda k, r: (r, k)),
            pl.BlockSpec((tr, tk), lambda k, r: (r, k)),
        ],
        out_specs=pl.BlockSpec((1, tk), lambda k, r: (0, k)),
        scratch_shapes=[
            pltpu.VMEM((1, tk), jnp.float32),
            pltpu.VMEM((1, tk), jnp.float32),
            pltpu.VMEM((1, tk), jnp.float32),
        ],
        compiler_params=pltpu.CompilerParams(
            dimension_semantics=("parallel", "arbitrary"),
            vmem_limit_bytes=48 * 1024 * 1024,
        ),
    )(x2, y2)

    # Back to keepdim=True layout.
    out = out2.reshape(tuple(inputs.shape[d] for d in kept))
    out = jnp.expand_dims(out, dims)
    return out


def tanimoto_dist(inputs, targets, *, smooth: float = 1e-5, dim=0):
    """Tanimoto distance score, matching TanimotoDist.forward (keepdim=True)."""
    ndim = inputs.ndim
    if isinstance(dim, int):
        dims = (dim % ndim,)
    else:
        dims = tuple(sorted(d % ndim for d in dim))
    return _tanimoto_dist_impl(inputs, targets, smooth=float(smooth), dims=dims)


# ---------------------------------------------------------------------------
# Self-test
# ---------------------------------------------------------------------------
def _reference(yhat, y, smooth=1e-5, dim=0):
    def _t(a, b):
        tpl = jnp.sum(a * b, axis=dim, keepdims=True)
        sq = jnp.sum(a ** 2 + b ** 2, axis=dim, keepdims=True)
        return (tpl + smooth) / (sq - tpl + smooth)

    return 0.5 * (_t(yhat, y) + _t(1.0 - yhat, 1.0 - y))


if __name__ == "__main__":
    key = jax.random.PRNGKey(0)
    k1, k2 = jax.random.split(key)

    # Predictions (probabilities) and binary targets, NCHW.
    inputs = jax.nn.sigmoid(jax.random.normal(k1, (2, 4, 16, 16), dtype=jnp.float32))
    targets = (jax.random.uniform(k2, (2, 4, 16, 16)) > 0.5).astype(jnp.float32)

    # Default dim=0 (as in the module).
    out = tanimoto_dist(inputs, targets, smooth=1e-5, dim=0)
    jax.block_until_ready(out)
    assert out.shape == (1, 4, 16, 16)
    expected = _reference(inputs, targets, smooth=1e-5, dim=0)
    assert jnp.allclose(out, expected, atol=1e-5, rtol=1e-5)

    # Non-default reduction axis (requires a wrapper-side transpose).
    out1 = tanimoto_dist(inputs, targets, smooth=1e-5, dim=1)
    jax.block_until_ready(out1)
    assert out1.shape == (2, 1, 16, 16)
    expected1 = _reference(inputs, targets, smooth=1e-5, dim=1)
    assert jnp.allclose(out1, expected1, atol=1e-5, rtol=1e-5)

    print("KERNEL_OK")
</pallas_src>

<mosaic_0001>
module attributes {stable_mosaic.version = 11 : i64} {
  func.func @_tanimoto_kernel(%arg0: i32, %arg1: i32, %arg2: memref<2x1024xf32, #tpu.memory_space<vmem>>, %arg3: memref<2x1024xf32, #tpu.memory_space<vmem>>, %arg4: memref<1x1024xf32, #tpu.memory_space<vmem>>, %arg5: memref<1x1024xf32, #tpu.memory_space<vmem>>, %arg6: memref<1x1024xf32, #tpu.memory_space<vmem>>, %arg7: memref<1x1024xf32, #tpu.memory_space<vmem>>) attributes {dimension_semantics = [#tpu.dimension_semantics<parallel>, #tpu.dimension_semantics<arbitrary>], iteration_bounds = array<i64: 1, 1>, scalar_prefetch = 0 : i64, scratch_operands = 3 : i64, tpu.core_type = #tpu.core_type<tc>, window_params = [{transform_indices = @transform_0, window_bounds = array<i64: 2, 1024>}, {transform_indices = @transform_1, window_bounds = array<i64: 2, 1024>}, {transform_indices = @transform_2, window_bounds = array<i64: 1, 1024>}]} {
    %c0_i32 = arith.constant 0 : i32
    %0 = arith.cmpi eq, %arg1, %c0_i32 : i32
    %1 = arith.extui %0 : i1 to i32
    %c0_i32_0 = arith.constant 0 : i32
    %2 = arith.cmpi ne, %1, %c0_i32_0 : i32
    scf.if %2 {
      %cst_20 = arith.constant 0.000000e+00 : f32
      %28 = vector.broadcast %cst_20 : f32 to vector<1x1024xf32>
      %c0_21 = arith.constant 0 : index
      %c0_22 = arith.constant 0 : index
      %29 = vector.load %arg5[%c0_21, %c0_22] : memref<1x1024xf32, #tpu.memory_space<vmem>>, vector<1x1024xf32>
      tpu.vector_store %arg5[%c0_21, %c0_22], %28 {strides = array<i32>} : memref<1x1024xf32, #tpu.memory_space<vmem>>, vector<1x1024xf32>,
      %cst_23 = arith.constant 0.000000e+00 : f32
      %30 = vector.broadcast %cst_23 : f32 to vector<1x1024xf32>
      %c0_24 = arith.constant 0 : index
      %c0_25 = arith.constant 0 : index
      %31 = vector.load %arg6[%c0_24, %c0_25] : memref<1x1024xf32, #tpu.memory_space<vmem>>, vector<1x1024xf32>
      tpu.vector_store %arg6[%c0_24, %c0_25], %30 {strides = array<i32>} : memref<1x1024xf32, #tpu.memory_space<vmem>>, vector<1x1024xf32>,
      %cst_26 = arith.constant 0.000000e+00 : f32
      %32 = vector.broadcast %cst_26 : f32 to vector<1x1024xf32>
      %c0_27 = arith.constant 0 : index
      %c0_28 = arith.constant 0 : index
      %33 = vector.load %arg7[%c0_27, %c0_28] : memref<1x1024xf32, #tpu.memory_space<vmem>>, vector<1x1024xf32>
      tpu.vector_store %arg7[%c0_27, %c0_28], %32 {strides = array<i32>} : memref<1x1024xf32, #tpu.memory_space<vmem>>, vector<1x1024xf32>,
    } else {
    }
    %c0 = arith.constant 0 : index
    %c0_1 = arith.constant 0 : index
    %3 = vector.load %arg2[%c0, %c0_1] : memref<2x1024xf32, #tpu.memory_space<vmem>>, vector<2x1024xf32>
    %c0_2 = arith.constant 0 : index
    %c0_3 = arith.constant 0 : index
    %4 = vector.load %arg3[%c0_2, %c0_3] : memref<2x1024xf32, #tpu.memory_space<vmem>>, vector<2x1024xf32>
    %c0_4 = arith.constant 0 : index
    %c0_5 = arith.constant 0 : index
    %5 = vector.load %arg5[%c0_4, %c0_5] : memref<1x1024xf32, #tpu.memory_space<vmem>>, vector<1x1024xf32>
    %6 = arith.mulf %3, %4 : vector<2x1024xf32>
    %cst = arith.constant dense<0.000000e+00> : vector<1024xf32>
    %7 = vector.multi_reduction <add>, %6, %cst [0] : vector<2x1024xf32> to vector<1024xf32>
    %8 = vector.shape_cast %7 : vector<1024xf32> to vector<1x1024xf32>
    %9 = arith.addf %5, %8 : vector<1x1024xf32>
    %c0_6 = arith.constant 0 : index
    %c0_7 = arith.constant 0 : index
    %10 = vector.load %arg5[%c0_6, %c0_7] : memref<1x1024xf32, #tpu.memory_space<vmem>>, vector<1x1024xf32>
    tpu.vector_store %arg5[%c0_6, %c0_7], %9 {strides = array<i32>} : memref<1x1024xf32, #tpu.memory_space<vmem>>, vector<1x1024xf32>,
    %c0_8 = arith.constant 0 : index
    %c0_9 = arith.constant 0 : index
    %11 = vector.load %arg6[%c0_8, %c0_9] : memref<1x1024xf32, #tpu.memory_space<vmem>>, vector<1x1024xf32>
    %12 = arith.mulf %3, %3 : vector<2x1024xf32>
    %13 = arith.mulf %4, %4 : vector<2x1024xf32>
    %14 = arith.addf %12, %13 : vector<2x1024xf32>
    %cst_10 = arith.constant dense<0.000000e+00> : vector<1024xf32>
    %15 = vector.multi_reduction <add>, %14, %cst_10 [0] : vector<2x1024xf32> to vector<1024xf32>
    %16 = vector.shape_cast %15 : vector<1024xf32> to vector<1x1024xf32>
    %17 = arith.addf %11, %16 : vector<1x1024xf32>
    %c0_11 = arith.constant 0 : index
    %c0_12 = arith.constant 0 : index
    %18 = vector.load %arg6[%c0_11, %c0_12] : memref<1x1024xf32, #tpu.memory_space<vmem>>, vector<1x1024xf32>
    tpu.vector_store %arg6[%c0_11, %c0_12], %17 {strides = array<i32>} : memref<1x1024xf32, #tpu.memory_space<vmem>>, vector<1x1024xf32>,
    %c0_13 = arith.constant 0 : index
    %c0_14 = arith.constant 0 : index
    %19 = vector.load %arg7[%c0_13, %c0_14] : memref<1x1024xf32, #tpu.memory_space<vmem>>, vector<1x1024xf32>
    %20 = arith.addf %3, %4 : vector<2x1024xf32>
    %cst_15 = arith.constant dense<0.000000e+00> : vector<1024xf32>
    %21 = vector.multi_reduction <add>, %20, %cst_15 [0] : vector<2x1024xf32> to vector<1024xf32>
    %22 = vector.shape_cast %21 : vector<1024xf32> to vector<1x1024xf32>
    %23 = arith.addf %19, %22 : vector<1x1024xf32>
    %c0_16 = arith.constant 0 : index
    %c0_17 = arith.constant 0 : index
    %24 = vector.load %arg7[%c0_16, %c0_17] : memref<1x1024xf32, #tpu.memory_space<vmem>>, vector<1x1024xf32>
    tpu.vector_store %arg7[%c0_16, %c0_17], %23 {strides = array<i32>} : memref<1x1024xf32, #tpu.memory_space<vmem>>, vector<1x1024xf32>,
    %c0_i32_18 = arith.constant 0 : i32
    %25 = arith.cmpi eq, %arg1, %c0_i32_18 : i32
    %26 = arith.extui %25 : i1 to i32
    %c0_i32_19 = arith.constant 0 : i32
    %27 = arith.cmpi ne, %26, %c0_i32_19 : i32
    scf.if %27 {
      %c0_20 = arith.constant 0 : index
      %c0_21 = arith.constant 0 : index
      %28 = vector.load %arg5[%c0_20, %c0_21] : memref<1x1024xf32, #tpu.memory_space<vmem>>, vector<1x1024xf32>
      %c0_22 = arith.constant 0 : index
      %c0_23 = arith.constant 0 : index
      %29 = vector.load %arg6[%c0_22, %c0_23] : memref<1x1024xf32, #tpu.memory_space<vmem>>, vector<1x1024xf32>
      %c0_24 = arith.constant 0 : index
      %c0_25 = arith.constant 0 : index
      %30 = vector.load %arg7[%c0_24, %c0_25] : memref<1x1024xf32, #tpu.memory_space<vmem>>, vector<1x1024xf32>
      %cst_26 = arith.constant 9.99999974E-6 : f32
      %31 = vector.broadcast %cst_26 : f32 to vector<1x1024xf32>
      %32 = arith.addf %28, %31 : vector<1x1024xf32>
      %33 = arith.subf %29, %28 : vector<1x1024xf32>
      %cst_27 = arith.constant 9.99999974E-6 : f32
      %34 = vector.broadcast %cst_27 : f32 to vector<1x1024xf32>
      %35 = arith.addf %33, %34 : vector<1x1024xf32>
      %36 = arith.divf %32, %35 : vector<1x1024xf32>
      %cst_28 = arith.constant 2.000000e+00 : f32
      %37 = vector.broadcast %cst_28 : f32 to vector<1x1024xf32>
      %38 = arith.subf %37, %30 : vector<1x1024xf32>
      %39 = arith.addf %38, %28 : vector<1x1024xf32>
      %cst_29 = arith.constant 9.99999974E-6 : f32
      %40 = vector.broadcast %cst_29 : f32 to vector<1x1024xf32>
      %41 = arith.addf %39, %40 : vector<1x1024xf32>
      %42 = arith.subf %29, %28 : vector<1x1024xf32>
      %43 = arith.addf %38, %42 : vector<1x1024xf32>
      %cst_30 = arith.constant 9.99999974E-6 : f32
      %44 = vector.broadcast %cst_30 : f32 to vector<1x1024xf32>
      %45 = arith.addf %43, %44 : vector<1x1024xf32>
      %46 = arith.divf %41, %45 : vector<1x1024xf32>
      %47 = arith.addf %36, %46 : vector<1x1024xf32>
      %cst_31 = arith.constant 5.000000e-01 : f32
      %48 = vector.broadcast %cst_31 : f32 to vector<1x1024xf32>
      %49 = arith.mulf %48, %47 : vector<1x1024xf32>
      %c0_32 = arith.constant 0 : index
      %c0_33 = arith.constant 0 : index
      %50 = vector.load %arg4[%c0_32, %c0_33] : memref<1x1024xf32, #tpu.memory_space<vmem>>, vector<1x1024xf32>
      tpu.vector_store %arg4[%c0_32, %c0_33], %49 {strides = array<i32>} : memref<1x1024xf32, #tpu.memory_space<vmem>>, vector<1x1024xf32>,
    } else {
    }
    return
  }
  func.func @transform_0(%arg0: i32, %arg1: i32) -> (i32, i32) {
    %c0_i32 = arith.constant 0 : i32
    return %arg1, %arg0 : i32, i32
  }
  func.func @transform_1(%arg0: i32, %arg1: i32) -> (i32, i32) {
    %c0_i32 = arith.constant 0 : i32
    return %arg1, %arg0 : i32, i32
  }
  func.func @transform_2(%arg0: i32, %arg1: i32) -> (i32, i32) {
    %c0_i32 = arith.constant 0 : i32
    %c0_i32_0 = arith.constant 0 : i32
    return %c0_i32, %arg0 : i32, i32
  }
}

</mosaic_0001>

<llo_original>
// kernel: _tanimoto_dist_impl.1
$region0: #{_tanimoto_dist_impl.1}
  #allocation0 [shape = 'u32[]', space=smem, size = 0x4, offset = 0x4, fixed_abs, tag = 'smem constant byte address 0x4 - core index']
  #allocation1 [shape = 'u32[72,128]{1,0:T(1,128)}', space=vmem, size = 0x9000, scoped, tag = 'internal scratch']
  #allocation2 [shape = 'f32[1,1024]{1,0:T(1,128)}', space=vmem, size = 0x1000, scoped, tag = 'scratch operand']
  #allocation3 [shape = 'f32[1,1024]{1,0:T(1,128)}', space=vmem, size = 0x1000, scoped, tag = 'scratch operand']
  #allocation4 [shape = 'f32[1,1024]{1,0:T(1,128)}', space=vmem, size = 0x1000, scoped, tag = 'scratch operand']
  %s0 = inlined_call_operand.vmem [shape: f32[2,1024], index: 0, kind: input, shape index: {}]
  %s1 = inlined_call_operand.vmem [shape: f32[2,1024], index: 1, kind: input, shape index: {}]
  %s2 = inlined_call_operand.vmem [shape: f32[1,1024], index: 2, kind: output, shape index: {}]
  %s3 = sld [smem:[#allocation0]]
  $region26: #{_tanimoto_dist_impl.1} parent=0
    _
  %s5 = ssub.s32 1, %s3
  %s6 = scalar_select 0, %s5, %s3
  // Predicated region
  $region2: #{_tanimoto_dist_impl.1} parent=0 // pred_check
    _
  $region3: #{_tanimoto_dist_impl.1} parent=0 // pred_check_branch
    %8 = sbr.rel (0) target = $region5
  $region4: #{_tanimoto_dist_impl.1} parent=0 // pred_region
    _
  $region5: #{_tanimoto_dist_impl.1} parent=0 // pred_fallthru
    _
  // Predicated region
  $region6: #{_tanimoto_dist_impl.1} parent=0 // pred_check
    _
  $region7: #{_tanimoto_dist_impl.1} parent=0 // pred_check_branch
    %10 = sbr.rel (0) target = $region9
  $region8: #{_tanimoto_dist_impl.1} parent=0 // pred_region
    _
  $region9: #{_tanimoto_dist_impl.1} parent=0 // pred_fallthru
    _
  %p11 = scmp.eq.s32.totalorder 0, 0
  // Predicated region
  $region10: #{_tanimoto_dist_impl.1} parent=0 // pred_check
    %p12 = pneg %p11
  $region11: #{_tanimoto_dist_impl.1} parent=0 // pred_check_branch
    %14 = sbr.rel (%p12) target = $region13
  $region12: #{_tanimoto_dist_impl.1} parent=0 // pred_region
    %15 = vst [vmem:[#allocation2] sm:$0xff] 0.0
    %16 = vst [vmem:[#allocation3] sm:$0xff] 0.0
    %17 = vst [vmem:[#allocation4] sm:$0xff] 0.0
  $region13: #{_tanimoto_dist_impl.1} parent=0 // pred_fallthru
    _
  %v18 = vld [vmem:[%s0] sm:$0xff]
  %v19 = vld [vmem:[%s0 + $0x8] sm:$0xff]
  %v20 = vld [vmem:[%s1] sm:$0xff]
  %v21 = vld [vmem:[%s1 + $0x8] sm:$0xff]
  %v22 = vld [vmem:[#allocation2] sm:$0xff]
  %v23 = vmul.f32 %v18, %v20
  %v24 = vmul.f32 %v19, %v21
  %27 = vst [vmem:[#allocation1] ss:$4 sm:$0xff] %v23
  %s28 = scalar_lea.vmem [#allocation1], 32
  %29 = vst [vmem:[%s28] ss:$4 sm:$0xff] %v24
  %v30 = vld.sshfl [vmem:[#allocation1] sm:$0xff pattern:$0x73625140]
  %v31 = vld.sshfl [vmem:[#allocation1 + $0x8] sm:$0xff pattern:$0x73625140]
  %v32 = vld.sshfl [vmem:[#allocation1 + $0x10] sm:$0xff pattern:$0x73625140]
  %v33 = vld.sshfl [vmem:[#allocation1 + $0x18] sm:$0xff pattern:$0x73625140]
  %v34 = vld.sshfl [vmem:[#allocation1 + $0x20] sm:$0xff pattern:$0x73625140]
  %v35 = vld.sshfl [vmem:[#allocation1 + $0x28] sm:$0xff pattern:$0x73625140]
  %v36 = vld.sshfl [vmem:[#allocation1 + $0x30] sm:$0xff pattern:$0x73625140]
  %v37 = vld.sshfl [vmem:[#allocation1 + $0x38] sm:$0xff pattern:$0x73625140]
  %vm46 = vcmask 1041408
  %v47 = vsel %vm46, %v30, 0.0
  %v48 = vrot.slane %v47, 4
  %v49 = vadd.f32 %v47, %v48
  %v50 = vrot.slane %v49, 2
  %v51 = vadd.f32 %v49, %v50
  %v52 = vrot.slane %v51, 1
  %v53 = vadd.f32 %v51, %v52
  %v54 = vsel %vm46, %v31, 0.0
  %v55 = vrot.slane %v54, 4
  %v56 = vadd.f32 %v54, %v55
  %v57 = vrot.slane %v56, 2
  %v58 = vadd.f32 %v56, %v57
  %v59 = vrot.slane %v58, 1
  %v60 = vadd.f32 %v58, %v59
  %v61 = vsel %vm46, %v32, 0.0
  %v62 = vrot.slane %v61, 4
  %v63 = vadd.f32 %v61, %v62
  %v64 = vrot.slane %v63, 2
  %v65 = vadd.f32 %v63, %v64
  %v66 = vrot.slane %v65, 1
  %v67 = vadd.f32 %v65, %v66
  %v68 = vsel %vm46, %v33, 0.0
  %v69 = vrot.slane %v68, 4
  %v70 = vadd.f32 %v68, %v69
  %v71 = vrot.slane %v70, 2
  %v72 = vadd.f32 %v70, %v71
  %v73 = vrot.slane %v72, 1
  %v74 = vadd.f32 %v72, %v73
  %v75 = vsel %vm46, %v34, 0.0
  %v76 = vrot.slane %v75, 4
  %v77 = vadd.f32 %v75, %v76
  %v78 = vrot.slane %v77, 2
  %v79 = vadd.f32 %v77, %v78
  %v80 = vrot.slane %v79, 1
  %v81 = vadd.f32 %v79, %v80
  %v82 = vsel %vm46, %v35, 0.0
  %v83 = vrot.slane %v82, 4
  %v84 = vadd.f32 %v82, %v83
  %v85 = vrot.slane %v84, 2
  %v86 = vadd.f32 %v84, %v85
  %v87 = vrot.slane %v86, 1
  %v88 = vadd.f32 %v86, %v87
  %v89 = vsel %vm46, %v36, 0.0
  %v90 = vrot.slane %v89, 4
  %v91 = vadd.f32 %v89, %v90
  %v92 = vrot.slane %v91, 2
  %v93 = vadd.f32 %v91, %v92
  %v94 = vrot.slane %v93, 1
  %v95 = vadd.f32 %v93, %v94
  %v96 = vsel %vm46, %v37, 0.0
  %v97 = vrot.slane %v96, 4
  %v98 = vadd.f32 %v96, %v97
  %v99 = vrot.slane %v98, 2
  %v100 = vadd.f32 %v98, %v99
  %v101 = vrot.slane %v100, 1
  %v102 = vadd.f32 %v100, %v101
  %v111 = vrot.slane %v60, 7
  %v112 = vrot.slane %v67, 6
  %v113 = vrot.slane %v74, 5
  %v114 = vrot.slane %v81, 4
  %v115 = vrot.slane %v88, 3
  %v116 = vrot.slane %v95, 2
  %v117 = vrot.slane %v102, 1
  %vm118 = vcmask 1040384
  %v119 = vsel %vm118, %v53, %v111
  %vm120 = vcmask 1042434
  %v121 = vsel %vm120, %v112, %v113
  %v122 = vsel %vm46, %v119, %v121
  %vm123 = vcmask 1044484
  %v124 = vsel %vm123, %v114, %v115
  %vm125 = vcmask 1046534
  %v126 = vsel %vm125, %v116, %v117
  %vm127 = vcmask 1045508
  %v128 = vsel %vm127, %v124, %v126
  %vm129 = vcmask 1043456
  %v130 = vsel %vm129, %v122, %v128
  %v132 = vadd.f32 %v22, %v130
  %133 = vst [vmem:[#allocation2] sm:$0xff] %v132
  %v134 = vld [vmem:[#allocation3] sm:$0xff]
  %v135 = vmul.f32 %v18, %v18
  %v136 = vmul.f32 %v19, %v19
  %v137 = vmul.f32 %v20, %v20
  %v138 = vmul.f32 %v21, %v21
  %v139 = vadd.f32 %v135, %v137
  %v140 = vadd.f32 %v136, %v138
  %143 = vst [vmem:[#allocation1] ss:$4 sm:$0xff] %v139
  %s144 = scalar_lea.vmem [#allocation1], 32
  %145 = vst [vmem:[%s144] ss:$4 sm:$0xff] %v140
  %v146 = vld.sshfl [vmem:[#allocation1] sm:$0xff pattern:$0x73625140]
  %v147 = vld.sshfl [vmem:[#allocation1 + $0x8] sm:$0xff pattern:$0x73625140]
  %v148 = vld.sshfl [vmem:[#allocation1 + $0x10] sm:$0xff pattern:$0x73625140]
  %v149 = vld.sshfl [vmem:[#allocation1 + $0x18] sm:$0xff pattern:$0x73625140]
  %v150 = vld.sshfl [vmem:[#allocation1 + $0x20] sm:$0xff pattern:$0x73625140]
  %v151 = vld.sshfl [vmem:[#allocation1 + $0x28] sm:$0xff pattern:$0x73625140]
  %v152 = vld.sshfl [vmem:[#allocation1 + $0x30] sm:$0xff pattern:$0x73625140]
  %v153 = vld.sshfl [vmem:[#allocation1 + $0x38] sm:$0xff pattern:$0x73625140]
  %v162 = vsel %vm46, %v146, 0.0
  %v163 = vrot.slane %v162, 4
  %v164 = vadd.f32 %v162, %v163
  %v165 = vrot.slane %v164, 2
  %v166 = vadd.f32 %v164, %v165
  %v167 = vrot.slane %v166, 1
  %v168 = vadd.f32 %v166, %v167
  %v169 = vsel %vm46, %v147, 0.0
  %v170 = vrot.slane %v169, 4
  %v171 = vadd.f32 %v169, %v170
  %v172 = vrot.slane %v171, 2
  %v173 = vadd.f32 %v171, %v172
  %v174 = vrot.slane %v173, 1
  %v175 = vadd.f32 %v173, %v174
  %v176 = vsel %vm46, %v148, 0.0
  %v177 = vrot.slane %v176, 4
  %v178 = vadd.f32 %v176, %v177
  %v179 = vrot.slane %v178, 2
  %v180 = vadd.f32 %v178, %v179
  %v181 = vrot.slane %v180, 1
  %v182 = vadd.f32 %v180, %v181
  %v183 = vsel %vm46, %v149, 0.0
  %v184 = vrot.slane %v183, 4
  %v185 = vadd.f32 %v183, %v184
  %v186 = vrot.slane %v185, 2
  %v187 = vadd.f32 %v185, %v186
  %v188 = vrot.slane %v187, 1
  %v189 = vadd.f32 %v187, %v188
  %v190 = vsel %vm46, %v150, 0.0
  %v191 = vrot.slane %v190, 4
  %v192 = vadd.f32 %v190, %v191
  %v193 = vrot.slane %v192, 2
  %v194 = vadd.f32 %v192, %v193
  %v195 = vrot.slane %v194, 1
  %v196 = vadd.f32 %v194, %v195
  %v197 = vsel %vm46, %v151, 0.0
  %v198 = vrot.slane %v197, 4
  %v199 = vadd.f32 %v197, %v198
  %v200 = vrot.slane %v199, 2
  %v201 = vadd.f32 %v199, %v200
  %v202 = vrot.slane %v201, 1
  %v203 = vadd.f32 %v201, %v202
  %v204 = vsel %vm46, %v152, 0.0
  %v205 = vrot.slane %v204, 4
  %v206 = vadd.f32 %v204, %v205
  %v207 = vrot.slane %v206, 2
  %v208 = vadd.f32 %v206, %v207
  %v209 = vrot.slane %v208, 1
  %v210 = vadd.f32 %v208, %v209
  %v211 = vsel %vm46, %v153, 0.0
  %v212 = vrot.slane %v211, 4
  %v213 = vadd.f32 %v211, %v212
  %v214 = vrot.slane %v213, 2
  %v215 = vadd.f32 %v213, %v214
  %v216 = vrot.slane %v215, 1
  %v217 = vadd.f32 %v215, %v216
  %v226 = vrot.slane %v175, 7
  %v227 = vrot.slane %v182, 6
  %v228 = vrot.slane %v189, 5
  %v229 = vrot.slane %v196, 4
  %v230 = vrot.slane %v203, 3
  %v231 = vrot.slane %v210, 2
  %v232 = vrot.slane %v217, 1
  %v233 = vsel %vm118, %v168, %v226
  %v234 = vsel %vm120, %v227, %v228
  %v235 = vsel %vm46, %v233, %v234
  %v236 = vsel %vm123, %v229, %v230
  %v237 = vsel %vm125, %v231, %v232
  %v238 = vsel %vm127, %v236, %v237
  %v239 = vsel %vm129, %v235, %v238
  %v241 = vadd.f32 %v134, %v239
  %242 = vst [vmem:[#allocation3] sm:$0xff] %v241
  %v243 = vld [vmem:[#allocation4] sm:$0xff]
  %v244 = vadd.f32 %v18, %v20
  %v245 = vadd.f32 %v19, %v21
  %248 = vst [vmem:[#allocation1] ss:$4 sm:$0xff] %v244
  %s249 = scalar_lea.vmem [#allocation1], 32
  %250 = vst [vmem:[%s249] ss:$4 sm:$0xff] %v245
  %v251 = vld.sshfl [vmem:[#allocation1] sm:$0xff pattern:$0x73625140]
  %v252 = vld.sshfl [vmem:[#allocation1 + $0x8] sm:$0xff pattern:$0x73625140]
  %v253 = vld.sshfl [vmem:[#allocation1 + $0x10] sm:$0xff pattern:$0x73625140]
  %v254 = vld.sshfl [vmem:[#allocation1 + $0x18] sm:$0xff pattern:$0x73625140]
  %v255 = vld.sshfl [vmem:[#allocation1 + $0x20] sm:$0xff pattern:$0x73625140]
  %v256 = vld.sshfl [vmem:[#allocation1 + $0x28] sm:$0xff pattern:$0x73625140]
  %v257 = vld.sshfl [vmem:[#allocation1 + $0x30] sm:$0xff pattern:$0x73625140]
  %v258 = vld.sshfl [vmem:[#allocation1 + $0x38] sm:$0xff pattern:$0x73625140]
  %v267 = vsel %vm46, %v251, 0.0
  %v268 = vrot.slane %v267, 4
  %v269 = vadd.f32 %v267, %v268
  %v270 = vrot.slane %v269, 2
  %v271 = vadd.f32 %v269, %v270
  %v272 = vrot.slane %v271, 1
  %v273 = vadd.f32 %v271, %v272
  %v274 = vsel %vm46, %v252, 0.0
  %v275 = vrot.slane %v274, 4
  %v276 = vadd.f32 %v274, %v275
  %v277 = vrot.slane %v276, 2
  %v278 = vadd.f32 %v276, %v277
  %v279 = vrot.slane %v278, 1
  %v280 = vadd.f32 %v278, %v279
  %v281 = vsel %vm46, %v253, 0.0
  %v282 = vrot.slane %v281, 4
  %v283 = vadd.f32 %v281, %v282
  %v284 = vrot.slane %v283, 2
  %v285 = vadd.f32 %v283, %v284
  %v286 = vrot.slane %v285, 1
  %v287 = vadd.f32 %v285, %v286
  %v288 = vsel %vm46, %v254, 0.0
  %v289 = vrot.slane %v288, 4
  %v290 = vadd.f32 %v288, %v289
  %v291 = vrot.slane %v290, 2
  %v292 = vadd.f32 %v290, %v291
  %v293 = vrot.slane %v292, 1
  %v294 = vadd.f32 %v292, %v293
  %v295 = vsel %vm46, %v255, 0.0
  %v296 = vrot.slane %v295, 4
  %v297 = vadd.f32 %v295, %v296
  %v298 = vrot.slane %v297, 2
  %v299 = vadd.f32 %v297, %v298
  %v300 = vrot.slane %v299, 1
  %v301 = vadd.f32 %v299, %v300
  %v302 = vsel %vm46, %v256, 0.0
  %v303 = vrot.slane %v302, 4
  %v304 = vadd.f32 %v302, %v303
  %v305 = vrot.slane %v304, 2
  %v306 = vadd.f32 %v304, %v305
  %v307 = vrot.slane %v306, 1
  %v308 = vadd.f32 %v306, %v307
  %v309 = vsel %vm46, %v257, 0.0
  %v310 = vrot.slane %v309, 4
  %v311 = vadd.f32 %v309, %v310
  %v312 = vrot.slane %v311, 2
  %v313 = vadd.f32 %v311, %v312
  %v314 = vrot.slane %v313, 1
  %v315 = vadd.f32 %v313, %v314
  %v316 = vsel %vm46, %v258, 0.0
  %v317 = vrot.slane %v316, 4
  %v318 = vadd.f32 %v316, %v317
  %v319 = vrot.slane %v318, 2
  %v320 = vadd.f32 %v318, %v319
  %v321 = vrot.slane %v320, 1
  %v322 = vadd.f32 %v320, %v321
  %v331 = vrot.slane %v280, 7
  %v332 = vrot.slane %v287, 6
  %v333 = vrot.slane %v294, 5
  %v334 = vrot.slane %v301, 4
  %v335 = vrot.slane %v308, 3
  %v336 = vrot.slane %v315, 2
  %v337 = vrot.slane %v322, 1
  %v338 = vsel %vm118, %v273, %v331
  %v339 = vsel %vm120, %v332, %v333
  %v340 = vsel %vm46, %v338, %v339
  %v341 = vsel %vm123, %v334, %v335
  %v342 = vsel %vm125, %v336, %v337
  %v343 = vsel %vm127, %v341, %v342
  %v344 = vsel %vm129, %v340, %v343
  %v346 = vadd.f32 %v243, %v344
  %347 = vst [vmem:[#allocation4] sm:$0xff] %v346
  // Predicated region
  $region14: #{_tanimoto_dist_impl.1} parent=0 // pred_check
    %p348 = pneg %p11
  $region15: #{_tanimoto_dist_impl.1} parent=0 // pred_check_branch
    %350 = sbr.rel (%p348) target = $region17
  $region16: #{_tanimoto_dist_impl.1} parent=0 // pred_region
    %v351 = vld [vmem:[#allocation2] sm:$0xff]
    %v352 = vld [vmem:[#allocation3] sm:$0xff]
    %v353 = vld [vmem:[#allocation4] sm:$0xff]
    %v354 = vadd.f32 %v351, 1e-05
    %v355 = vsub.f32 %v352, %v351
    %v356 = vadd.f32 %v355, 1e-05
    %v357 = vrcp.pop %v356
    %v358 = vmul.f32 %v356, %v357
    %v359 = vsub.f32 1.0, %v358
    %v360 = vmul.f32 %v357, %v359
    %v361 = vadd.f32 %v357, %v360
    %vm362 = vweird.f32 %v356
    %vm363 = vweird.f32 %v357
    %vm364 = vmor %vm362, %vm363
    %v365 = vsel %vm364, %v357, %v361
    %v366 = vand.u32 2147483647, %v356
    %vm367 = vcmp.eq.f32.partialorder %v366, 8.507059e+37
    %v368 = vand.u32 %v356, 2147483648
    %v369 = vor.u32 1.1754944e-38, %v368
    %v370 = vsel %vm367, %v369, %v365
    %v371 = vmul.f32 %v354, %v370
    %v372 = vsub.f32 2.0, %v353
    %v373 = vadd.f32 %v372, %v351
    %v374 = vadd.f32 %v373, 1e-05
    %v375 = vadd.f32 %v372, %v355
    %v376 = vadd.f32 %v375, 1e-05
    %v377 = vrcp.pop %v376
    %v378 = vmul.f32 %v376, %v377
    %v379 = vsub.f32 1.0, %v378
    %v380 = vmul.f32 %v377, %v379
    %v381 = vadd.f32 %v377, %v380
    %vm382 = vweird.f32 %v376
    %vm383 = vweird.f32 %v377
    %vm384 = vmor %vm382, %vm383
    %v385 = vsel %vm384, %v377, %v381
    %v386 = vand.u32 2147483647, %v376
    %vm387 = vcmp.eq.f32.partialorder %v386, 8.507059e+37
    %v388 = vand.u32 %v376, 2147483648
    %v389 = vor.u32 1.1754944e-38, %v388
    %v390 = vsel %vm387, %v389, %v385
    %v391 = vmul.f32 %v374, %v390
    %v392 = vadd.f32 %v371, %v391
    %v393 = vmul.f32 %v392, 0.5
    %394 = vst [vmem:[%s2] sm:$0xff] %v393
  $region17: #{_tanimoto_dist_impl.1} parent=0 // pred_fallthru
    _
  // Predicated region
  $region18: #{_tanimoto_dist_impl.1} parent=0 // pred_check
    _
  $region19: #{_tanimoto_dist_impl.1} parent=0 // pred_check_branch
    %396 = sbr.rel (0) target = $region21
  $region20: #{_tanimoto_dist_impl.1} parent=0 // pred_region
    _
  $region21: #{_tanimoto_dist_impl.1} parent=0 // pred_fallthru
    _
  // Predicated region
  $region22: #{_tanimoto_dist_impl.1} parent=0 // pred_check
    _
  $region23: #{_tanimoto_dist_impl.1} parent=0 // pred_check_branch
    %398 = sbr.rel (0) target = $region25
  $region24: #{_tanimoto_dist_impl.1} parent=0 // pred_region
    _
  $region25: #{_tanimoto_dist_impl.1} parent=0 // pred_fallthru
    _

</llo_original>
